<compile_context>
chip_gen: v7x
topology: tpu7x:2x2x1
jax: 0.10.0
libtpu: 0.0.40
codegen_flags: <defaults>
</compile_context>

<pallas_src>
import numpy as np

import jax
import jax.numpy as jnp
from jax import lax
from jax.experimental import pallas as pl
from jax.experimental.pallas import tpu as pltpu


# ----------------------------------------------------------------------------
# helpers
# ----------------------------------------------------------------------------
def _rup(x, m):
    return (x + m - 1) // m * m


def _apply_act(y, act):
    if act == "lrelu":
        return jnp.where(y >= 0, y, 0.2 * y)
    if act == "relu":
        return jnp.maximum(y, 0.0)
    if act == "tanh":
        return jnp.tanh(y)
    if act == "tanh2":            # dec8 Tanh + the extra torch.tanh in forward()
        return jnp.tanh(jnp.tanh(y))
    return y


# ----------------------------------------------------------------------------
# Pallas matmul kernel (conv / conv-transpose hot path after im2col).
# bf16 inputs, f32 accumulation, optional fused activation epilogue.
# ----------------------------------------------------------------------------
def _make_matmul_kernel(act):
    def kernel(a_ref, b_ref, o_ref, acc_ref):
        @pl.when(pl.program_id(2) == 0)
        def _():
            acc_ref[...] = jnp.zeros_like(acc_ref)

        acc_ref[...] += jnp.dot(a_ref[...], b_ref[...],
                                preferred_element_type=jnp.float32)

        @pl.when(pl.program_id(2) == pl.num_programs(2) - 1)
        def _():
            o_ref[...] = _apply_act(acc_ref[...], act).astype(o_ref.dtype)

    return kernel


def pallas_matmul(a, b, act=None, out_dtype=jnp.bfloat16,
                  tm=256, tn=256, tk=512):
    """(M,K) @ (K,N) -> (M,N). bf16 MXU inputs, f32 accumulator, fused act."""
    M, K = a.shape
    K2, N = b.shape
    assert K == K2
    a = a.astype(jnp.bfloat16)
    b = b.astype(jnp.bfloat16)

    # Adaptive tiles: don't pad tiny M (deep 1x1/2x2 layers) all the way to 256.
    tm = min(tm, _rup(M, 16))
    tn = min(tn, _rup(N, 128))
    tk = min(tk, _rup(K, 128))
    Mp, Kp, Np = _rup(M, tm), _rup(K, tk), _rup(N, tn)
    if (Mp, Kp) != (M, K):
        a = jnp.pad(a, ((0, Mp - M), (0, Kp - K)))
    if (Kp, Np) != (K, N):
        b = jnp.pad(b, ((0, Kp - K), (0, Np - N)))

    out = pl.pallas_call(
        _make_matmul_kernel(act),
        out_shape=jax.ShapeDtypeStruct((Mp, Np), out_dtype),
        grid_spec=pltpu.PrefetchScalarGridSpec(
            num_scalar_prefetch=0,
            grid=(Mp // tm, Np // tn, Kp // tk),
            in_specs=[
                pl.BlockSpec((tm, tk), lambda i, j, k: (i, k)),
                pl.BlockSpec((tk, tn), lambda i, j, k: (k, j)),
            ],
            out_specs=pl.BlockSpec((tm, tn), lambda i, j, k: (i, j)),
            scratch_shapes=[pltpu.VMEM((tm, tn), jnp.float32)],
        ),
        compiler_params=pltpu.CompilerParams(
            dimension_semantics=("parallel", "parallel", "arbitrary")),
    )(a, b)
    if (Mp, Np) != (M, N):
        out = out[:M, :N]
    return out


# ----------------------------------------------------------------------------
# InstanceNorm (affine=False, eps=1e-5, biased var) + activation (+ dropout),
# computed directly on the (N, H*W, C) layout (channels on lanes).
#   kernel 1: per-(n, c) sum / sumsq accumulated over H*W row-blocks
#   kernel 2: normalize + act (+ dropout) elementwise over row-blocks
# ----------------------------------------------------------------------------
def _stats_kernel(x_ref, sum_ref, ssq_ref, acc_s, acc_q):
    h = pl.program_id(1)

    @pl.when(h == 0)
    def _():
        acc_s[...] = jnp.zeros_like(acc_s)
        acc_q[...] = jnp.zeros_like(acc_q)

    x = x_ref[...].astype(jnp.float32)               # (1, thw, C)
    acc_s[...] += jnp.sum(x, axis=1, keepdims=True)
    acc_q[...] += jnp.sum(x * x, axis=1, keepdims=True)

    @pl.when(h == pl.num_programs(1) - 1)
    def _():
        sum_ref[...] = acc_s[...]
        ssq_ref[...] = acc_q[...]


def _hash_u32(x):
    # Simple avalanche hash (murmur3-style finalizer) on uint32 positions.
    x = x * np.uint32(0x9E3779B9)
    x = x ^ (x >> 16)
    x = x * np.uint32(0x85EBCA6B)
    x = x ^ (x >> 13)
    x = x * np.uint32(0xC2B2AE35)
    x = x ^ (x >> 16)
    return x


def _make_norm_act_kernel(act, hw, thw, C, drop_seed=None, p=0.5, eps=1e-5):
    inv_hw = np.float32(1.0 / float(hw))
    if drop_seed is not None:
        keep_scale = np.float32(1.0 / (1.0 - p))
        thresh = np.uint32(int(round((1.0 - p) * 4294967296.0)) - 1)
        seed_mix = np.uint32((int(drop_seed) * 0x632BE59B) & 0xFFFFFFFF)

    def kernel(x_ref, sum_ref, ssq_ref, o_ref):
        x = x_ref[...].astype(jnp.float32)           # (1, thw, C)
        mean = sum_ref[...] * inv_hw                 # (1, 1, C)
        var = jnp.maximum(ssq_ref[...] * inv_hw - mean * mean, 0.0)
        y = (x - mean) * lax.rsqrt(var + eps)
        y = _apply_act(y, act)
        if drop_seed is not None:
            # TODO(synk): torch's dropout RNG stream is not reproducible bit-for-bit;
            # Bernoulli(1-p) keep-mask from a per-position hash, scaled by 1/(1-p).
            bid = (pl.program_id(0) * pl.num_programs(1)
                   + pl.program_id(1)).astype(jnp.uint32)
            r = lax.broadcasted_iota(jnp.int32, (1, thw, C), 1).astype(jnp.uint32)
            c = lax.broadcasted_iota(jnp.int32, (1, thw, C), 2).astype(jnp.uint32)
            pos = bid * np.uint32(thw * C) + r * np.uint32(C) + c
            hbits = _hash_u32(pos ^ seed_mix)
            y = jnp.where(hbits < thresh, y * keep_scale, 0.0)
        o_ref[...] = y.astype(o_ref.dtype)

    return kernel


def instance_norm_act(x_nhwc, act, drop_seed=None):
    N, H, W, C = x_nhwc.shape
    HW = H * W
    thw = HW if HW <= 1024 else 1024
    assert HW % thw == 0
    nh = HW // thw
    x3 = x_nhwc.reshape(N, HW, C)

    s, q = pl.pallas_call(
        _stats_kernel,
        out_shape=(jax.ShapeDtypeStruct((N, 1, C), jnp.float32),
                   jax.ShapeDtypeStruct((N, 1, C), jnp.float32)),
        grid=(N, nh),
        in_specs=[pl.BlockSpec((1, thw, C), lambda n, h: (n, h, 0))],
        out_specs=(pl.BlockSpec((1, 1, C), lambda n, h: (n, 0, 0)),
                   pl.BlockSpec((1, 1, C), lambda n, h: (n, 0, 0))),
        scratch_shapes=[pltpu.VMEM((1, 1, C), jnp.float32),
                        pltpu.VMEM((1, 1, C), jnp.float32)],
        compiler_params=pltpu.CompilerParams(
            dimension_semantics=("parallel", "arbitrary")),
    )(x3)

    y3 = pl.pallas_call(
        _make_norm_act_kernel(act, HW, thw, C, drop_seed=drop_seed),
        out_shape=jax.ShapeDtypeStruct(x3.shape, x3.dtype),
        grid=(N, nh),
        in_specs=[pl.BlockSpec((1, thw, C), lambda n, h: (n, h, 0)),
                  pl.BlockSpec((1, 1, C), lambda n, h: (n, 0, 0)),
                  pl.BlockSpec((1, 1, C), lambda n, h: (n, 0, 0))],
        out_specs=pl.BlockSpec((1, thw, C), lambda n, h: (n, h, 0)),
        compiler_params=pltpu.CompilerParams(
            dimension_semantics=("parallel", "parallel")),
    )(x3, s, q)
    return y3.reshape(N, H, W, C)


# ----------------------------------------------------------------------------
# Conv2d (k=4, s=2, p=1, bias=False): im2col + Pallas matmul.
# TODO(synk): patch extraction is still materialized by XLA; fusing it into the
# matmul kernel (halo'd VMEM tiles) would cut HBM traffic further.
# ----------------------------------------------------------------------------
def _im2col(xp, kh, kw, s, hout, wout):
    N, Hp, Wp, C = xp.shape
    cols = []
    for ki in range(kh):
        for kj in range(kw):
            cols.append(xp[:, ki:ki + s * (hout - 1) + 1:s,
                           kj:kj + s * (wout - 1) + 1:s, :])
    p = jnp.stack(cols, axis=-1)                     # (N,hout,wout,C,kh*kw)
    return p.reshape(N * hout * wout, C * kh * kw)   # C-major, then (ki,kj)


def conv2d_s2(x, w, act=None):
    """x: NHWC, w: (Cout, Cin, 4, 4) torch layout; stride 2, pad 1."""
    N, H, W, C = x.shape
    Cout = w.shape[0]
    Hout, Wout = H // 2, W // 2
    xp = jnp.pad(x, ((0, 0), (1, 1), (1, 1), (0, 0)))
    patches = _im2col(xp, 4, 4, 2, Hout, Wout)
    wmat = w.reshape(Cout, -1).T                     # (Cin*16, Cout)
    out = pallas_matmul(patches, wmat, act=act)
    return out.reshape(N, Hout, Wout, Cout)


# ----------------------------------------------------------------------------
# ConvTranspose2d (k=4, s=2, p=1, bias=False) via subpixel / phase decomposition:
# each output parity (ry, rx) is a 2x2 conv of the UNdilated input with the
# matching 2x2 slice of the flipped kernel; the 4 results are interleaved.
# ----------------------------------------------------------------------------
def conv_transpose2d_s2(x, w, act=None):
    """x: NHWC, w: (Cin, Cout, 4, 4) torch layout; stride 2, pad 1."""
    N, H, W, Cin = x.shape
    Cout = w.shape[1]
    # equivalent forward-conv weight: flip spatially, swap in/out channels
    weq = jnp.flip(w, axis=(2, 3)).transpose(1, 0, 2, 3)   # (Cout, Cin, 4, 4)
    xp = jnp.pad(x, ((0, 0), (1, 1), (1, 1), (0, 0)))      # spatial halo of 1

    phase_rows = []
    for ry in (0, 1):
        ky = np.array([0, 2]) if ry == 0 else np.array([1, 3])
        dy = (-1, 0) if ry == 0 else (0, 1)
        row_out = []
        for rx in (0, 1):
            kx = np.array([0, 2]) if rx == 0 else np.array([1, 3])
            dx = (-1, 0) if rx == 0 else (0, 1)
            taps = []
            for a in range(2):
                for b in range(2):
                    taps.append(xp[:, 1 + dy[a]:1 + dy[a] + H,
                                   1 + dx[b]:1 + dx[b] + W, :])
            patches = jnp.stack(taps, axis=-1).reshape(N * H * W, Cin * 4)
            wph = weq[:, :, ky, :][:, :, :, kx]             # (Cout, Cin, 2, 2)
            wmat = wph.reshape(Cout, Cin * 4).T             # (Cin*4, Cout)
            o = pallas_matmul(patches, wmat, act=act).reshape(N, H, W, Cout)
            row_out.append(o)
        phase_rows.append(row_out)

    z = jnp.stack([jnp.stack(r, axis=0) for r in phase_rows], axis=0)
    # z: (2[ry], 2[rx], N, H, W, Cout) -> (N, H, ry, W, rx, Cout) -> (N, 2H, 2W, Cout)
    z = z.transpose(2, 3, 0, 4, 1, 5)
    return z.reshape(N, 2 * H, 2 * W, Cout)


# ----------------------------------------------------------------------------
# Generator parameters + forward
# ----------------------------------------------------------------------------
ENC_SPECS = [(None, 64), (64, 128), (128, 256), (256, 512),
             (512, 512), (512, 512), (512, 512), (512, 512)]
DEC_SPECS = [(512, 512), (1024, 512), (1024, 512), (1024, 512),
             (1024, 256), (512, 128), (256, 64), (128, 3)]


def init_generator_params(key, input_channels):
    enc_specs = [(input_channels if cin is None else cin, cout)
                 for cin, cout in ENC_SPECS]
    keys = jax.random.split(key, 16)
    params = {"enc": [], "dec": []}
    for i, (cin, cout) in enumerate(enc_specs):
        params["enc"].append(
            0.05 * jax.random.normal(keys[i], (cout, cin, 4, 4), jnp.float32))
    for i, (cin, cout) in enumerate(DEC_SPECS):
        params["dec"].append(
            0.05 * jax.random.normal(keys[8 + i], (cin, cout, 4, 4), jnp.float32))
    return params


def generator_forward(x_nchw, params):
    x = x_nchw.transpose(0, 2, 3, 1).astype(jnp.bfloat16)   # NCHW -> NHWC, bf16
    we, wd = params["enc"], params["dec"]

    # --- encoders ---
    e1 = conv2d_s2(x, we[0], act="lrelu")                    # no norm, act fused
    e2 = instance_norm_act(conv2d_s2(e1, we[1]), "lrelu")
    e3 = instance_norm_act(conv2d_s2(e2, we[2]), "lrelu")
    e4 = instance_norm_act(conv2d_s2(e3, we[3]), "lrelu")
    e5 = instance_norm_act(conv2d_s2(e4, we[4]), "lrelu")
    e6 = instance_norm_act(conv2d_s2(e5, we[5]), "lrelu")
    e7 = instance_norm_act(conv2d_s2(e6, we[6]), "lrelu")
    e8 = conv2d_s2(e7, we[7], act="relu")                    # no norm, act fused

    cat = lambda a, b: jnp.concatenate([a, b], axis=-1)      # channel concat (NHWC)

    # --- decoders (norm + act + dropout fused in one Pallas pass) ---
    # TODO(synk): dropout masks use fixed per-layer seeds (same mask every call),
    # matching the previously-reviewed implementation; torch's RNG stream differs.
    d8 = instance_norm_act(conv_transpose2d_s2(e8, wd[0]), "relu", drop_seed=1)
    d7 = instance_norm_act(conv_transpose2d_s2(cat(e7, d8), wd[1]), "relu", drop_seed=2)
    d6 = instance_norm_act(conv_transpose2d_s2(cat(e6, d7), wd[2]), "relu", drop_seed=3)
    d5 = instance_norm_act(conv_transpose2d_s2(cat(e5, d6), wd[3]), "relu")
    d4 = instance_norm_act(conv_transpose2d_s2(cat(e4, d5), wd[4]), "relu")
    d3 = instance_norm_act(conv_transpose2d_s2(cat(e3, d4), wd[5]), "relu")
    d2 = instance_norm_act(conv_transpose2d_s2(cat(e2, d3), wd[6]), "relu")
    # dec8 Tanh + the extra torch.tanh in Generator.forward fused as "tanh2"
    d1 = conv_transpose2d_s2(cat(e1, d2), wd[7], act="tanh2")

    return d1.transpose(0, 3, 1, 2).astype(jnp.float32)      # NHWC -> NCHW


# ----------------------------------------------------------------------------
if __name__ == "__main__":
    key = jax.random.PRNGKey(0)
    kx, kp = jax.random.split(key)

    # Smallest spatial size compatible with 8 stride-2 encoders is 256.
    input_channels = 3
    x = jax.random.normal(kx, (1, input_channels, 256, 256), jnp.float32)

    params = init_generator_params(kp, input_channels)

    out = generator_forward(x, params)
    out = jax.block_until_ready(out)

    assert out.shape == (1, 3, 256, 256), out.shape
    assert bool(jnp.all(jnp.isfinite(out)))
    print("KERNEL_OK")
</pallas_src>

<mosaic_0001>
module attributes {stable_mosaic.version = 11 : i64} {
  func.func @kernel(%arg0: i32, %arg1: i32, %arg2: i32, %arg3: memref<256x128xbf16, #tpu.memory_space<vmem>>, %arg4: memref<128x128xbf16, #tpu.memory_space<vmem>>, %arg5: memref<256x128xbf16, #tpu.memory_space<vmem>>, %arg6: memref<256x128xf32, #tpu.memory_space<vmem>>) attributes {dimension_semantics = [#tpu.dimension_semantics<parallel>, #tpu.dimension_semantics<parallel>, #tpu.dimension_semantics<arbitrary>], iteration_bounds = array<i64: 64, 1, 1>, scalar_prefetch = 0 : i64, scratch_operands = 1 : i64, tpu.core_type = #tpu.core_type<tc>, window_params = [{transform_indices = @transform_0, window_bounds = array<i64: 256, 128>}, {transform_indices = @transform_1, window_bounds = array<i64: 128, 128>}, {transform_indices = @transform_2, window_bounds = array<i64: 256, 128>}]} {
    %c0_i32 = arith.constant 0 : i32
    %0 = arith.cmpi eq, %arg2, %c0_i32 : i32
    %1 = arith.extui %0 : i1 to i32
    %c0_i32_0 = arith.constant 0 : i32
    %2 = arith.cmpi ne, %1, %c0_i32_0 : i32
    scf.if %2 {
      %cst_10 = arith.constant 0.000000e+00 : f32
      %12 = vector.broadcast %cst_10 : f32 to vector<256x128xf32>
      %c0_11 = arith.constant 0 : index
      %c0_12 = arith.constant 0 : index
      %13 = vector.load %arg6[%c0_11, %c0_12] : memref<256x128xf32, #tpu.memory_space<vmem>>, vector<256x128xf32>
      tpu.vector_store %arg6[%c0_11, %c0_12], %12 {strides = array<i32>} : memref<256x128xf32, #tpu.memory_space<vmem>>, vector<256x128xf32>,
    } else {
    }
    %c0 = arith.constant 0 : index
    %c0_1 = arith.constant 0 : index
    %3 = vector.load %arg6[%c0, %c0_1] : memref<256x128xf32, #tpu.memory_space<vmem>>, vector<256x128xf32>
    %c0_2 = arith.constant 0 : index
    %c0_3 = arith.constant 0 : index
    %4 = vector.load %arg3[%c0_2, %c0_3] : memref<256x128xbf16, #tpu.memory_space<vmem>>, vector<256x128xbf16>
    %c0_4 = arith.constant 0 : index
    %c0_5 = arith.constant 0 : index
    %5 = vector.load %arg4[%c0_4, %c0_5] : memref<128x128xbf16, #tpu.memory_space<vmem>>, vector<128x128xbf16>
    %cst = arith.constant dense<0.000000e+00> : vector<256x128xf32>
    %6 = tpu.matmul %4, %5, %cst {dimension_numbers = #tpu.dot_dimension_numbers<[1], [0], [0], [1], [0, 0, 1, 1], [], []>} : vector<256x128xbf16>, vector<128x128xbf16>, vector<256x128xf32> -> vector<256x128xf32>
    %7 = arith.addf %3, %6 : vector<256x128xf32>
    %c0_6 = arith.constant 0 : index
    %c0_7 = arith.constant 0 : index
    %8 = vector.load %arg6[%c0_6, %c0_7] : memref<256x128xf32, #tpu.memory_space<vmem>>, vector<256x128xf32>
    tpu.vector_store %arg6[%c0_6, %c0_7], %7 {strides = array<i32>} : memref<256x128xf32, #tpu.memory_space<vmem>>, vector<256x128xf32>,
    %c0_i32_8 = arith.constant 0 : i32
    %9 = arith.cmpi eq, %arg2, %c0_i32_8 : i32
    %10 = arith.extui %9 : i1 to i32
    %c0_i32_9 = arith.constant 0 : i32
    %11 = arith.cmpi ne, %10, %c0_i32_9 : i32
    scf.if %11 {
      %c0_10 = arith.constant 0 : index
      %c0_11 = arith.constant 0 : index
      %12 = vector.load %arg6[%c0_10, %c0_11] : memref<256x128xf32, #tpu.memory_space<vmem>>, vector<256x128xf32>
      %cst_12 = arith.constant 0.000000e+00 : f32
      %13 = vector.broadcast %cst_12 : f32 to vector<256x128xf32>
      %14 = arith.cmpf oge, %12, %13 : vector<256x128xf32>
      %cst_13 = arith.constant 2.000000e-01 : f32
      %15 = vector.broadcast %cst_13 : f32 to vector<256x128xf32>
      %16 = arith.mulf %15, %12 : vector<256x128xf32>
      %17 = arith.select %14, %12, %16 : vector<256x128xi1>, vector<256x128xf32>
      %18 = arith.truncf %17 : vector<256x128xf32> to vector<256x128xbf16>
      %c0_14 = arith.constant 0 : index
      %c0_15 = arith.constant 0 : index
      %19 = vector.load %arg5[%c0_14, %c0_15] : memref<256x128xbf16, #tpu.memory_space<vmem>>, vector<256x128xbf16>
      tpu.vector_store %arg5[%c0_14, %c0_15], %18 {strides = array<i32>} : memref<256x128xbf16, #tpu.memory_space<vmem>>, vector<256x128xbf16>,
    } else {
    }
    return
  }
  func.func @transform_0(%arg0: i32, %arg1: i32, %arg2: i32) -> (i32, i32) {
    %c0_i32 = arith.constant 0 : i32
    return %arg0, %arg2 : i32, i32
  }
  func.func @transform_1(%arg0: i32, %arg1: i32, %arg2: i32) -> (i32, i32) {
    %c0_i32 = arith.constant 0 : i32
    return %arg2, %arg1 : i32, i32
  }
  func.func @transform_2(%arg0: i32, %arg1: i32, %arg2: i32) -> (i32, i32) {
    %c0_i32 = arith.constant 0 : i32
    return %arg0, %arg1 : i32, i32
  }
}

</mosaic_0001>

<llo_original>
// kernel: tpu_custom_call.1
$region0: #{tpu_custom_call.1}
  #allocation0 [shape = 'u32[]', space=smem, size = 0x4, offset = 0x4, fixed_abs, tag = 'smem constant byte address 0x4 - core index']
  #allocation1 [shape = 'u32[144,128]{1,0:T(1,128)}', space=vmem, size = 0x12000, scoped, tag = 'internal scratch']
  #allocation2 [shape = 'f32[256,128]{1,0:T(8,128)}', space=vmem, size = 0x20000, scoped, tag = 'scratch operand']
  %s0 = inlined_call_operand.hbm [shape: bf16[16384,128], index: 0, kind: input, shape index: {}]
  %s1 = inlined_call_operand.hbm [shape: bf16[128,128], index: 1, kind: input, shape index: {}]
  %s2 = inlined_call_operand.hbm [shape: bf16[16384,128], index: 2, kind: output, shape index: {}]
  %s3 = sld [smem:[#allocation0]]
  $region57: #{tpu_custom_call.1} parent=0
    _
  %s5 = ssub.s32 1, %s3
  %s6 = scalar_select 0, %s5, %s3
  $region1: #{tpu_custom_call.1} parent=0
    #allocation3 [shape = 'u8[131072]{0}', space=vmem, size = 0x20000, scoped, tag = 'input window, operand 0']
    #allocation4 [shape = 's32[2]{0}', space=sflag, size = 0x8, scoped, tag = 'scoped memory for tpu_custom_call.1']
    #allocation5 [shape = 's32[2]{0}', space=sflag, size = 0x8, scoped, tag = 'scoped memory for tpu_custom_call.1']
    #allocation6 [shape = 'u8[32768]{0}', space=vmem, size = 0x8000, scoped, tag = 'input window, operand 1, single buffered']
    #allocation7 [shape = 's32[1]{0}', space=sflag, size = 0x4, scoped, tag = 'scoped memory for tpu_custom_call.1']
    #allocation8 [shape = 'u8[131072]{0}', space=vmem, size = 0x20000, scoped, tag = 'output window, operand 0']
    %7 = vsyncpa [#allocation4], 0
    %s8 = scalar_lea.sflag [#allocation4], 1
    %9 = vsyncpa %s8, 0
    %10 = vsyncpa [#allocation7], 0
    %11 = vsyncpa [#allocation5], 0
    %s12 = scalar_lea.sflag [#allocation5], 1
    %13 = vsyncpa %s12, 0
    loop: start=0, step=1, limit=66
    $region2: #{tpu_custom_call.1} parent=1 // loop_pre_header
      _
    $region3: #{tpu_custom_call.1} parent=1 // loop_header
      %s15 = sphi 0, %s19
      %p16 = scmp.ge.s32.totalorder %s15, 66
      %s22 = sphi 0, %s41
      %s23 = sphi 0, %s37
      %s24 = sphi 0, %s33
      %s25 = sphi 0, %s22
      %s26 = sphi 0, %s23
      %s27 = sphi 0, %s24
      %s28 = sphi 0, %s25
      %s29 = sphi 0, %s26
      %s30 = sphi 0, %s27
      %s46 = sphi 0, %s48
      %s49 = sphi 0, %s46
      %s50 = sphi 0, %s49
      %s66 = sphi 0, %s50
      %s74 = sphi 0, %s76
      %s77 = sphi 0, %s74
      %s78 = sphi 0, %s77
      %s94 = sphi 0, %s78
      %s102 = sphi 0, %s104
      %s105 = sphi 0, %s102
      %s106 = sphi 0, %s105
      %s122 = sphi 0, %s106
    $region4: #{tpu_custom_call.1} parent=1 // loop_header_branch
      %18 = sbr.rel (%p16) target = $region8
    $region5: #{tpu_custom_call.1} parent=1 // loop_body
      %s20 = ssub.s32 %s15, 1
      %s21 = ssub.s32 %s15, 2
      %s31 = sadd.s32 1, %s24
      %p32 = scmp.ge.s32.totalorder %s31, 1
      %s33 = scalar_select %p32, 0, %s31
      %s34 = sadd.s32 1, %s23
      %s35 = scalar_select %p32, %s34, %s23
      %p36 = scmp.ge.s32.totalorder %s35, 1
      %s37 = scalar_select %p36, 0, %s35
      %s38 = sadd.s32 1, %s22
      %s39 = scalar_select %p36, %s38, %s22
      %p40 = scmp.ge.s32.totalorder %s39, 64
      %s41 = scalar_select %p40, 0, %s39
      %s42 = ssub.s32 %s22, %s41
      %s43 = ssub.s32 %s24, %s33
      %s44 = sor.u32 %s42, %s43
      %p45 = scmp.eq.s32.totalorder %s44, 0
      %s47 = sadd.s32 %s46, 1
      %s48 = scalar_select %p45, %s46, %s47
      %p51 = pneg %p45
      %p52 = scmp.eq.s32.totalorder %s15, 63
      %p53 = por %p51, %p52
      %p54 = scmp.ne.s32.totalorder %s46, %s49
      %p55 = scmp.eq.s32.totalorder %s15, 0
      %p56 = por %p54, %p55
      %p57 = scmp.ne.s32.totalorder %s46, %s49
      %p58 = scmp.eq.s32.totalorder %s20, 63
      %p59 = por %p57, %p58
      %p60 = scmp.ne.s32.totalorder %s49, %s50
      %p61 = scmp.eq.s32.totalorder %s20, 0
      %p62 = por %p60, %p61
      %p63 = scmp.ne.s32.totalorder %s49, %s50
      %p64 = scmp.eq.s32.totalorder %s21, 63
      %p65 = por %p63, %p64
      %p67 = scmp.ne.s32.totalorder %s50, %s66
      %p68 = scmp.eq.s32.totalorder %s21, 0
      %p69 = por %p67, %p68
      %s70 = ssub.s32 %s24, %s33
      %s71 = ssub.s32 %s23, %s37
      %s72 = sor.u32 %s70, %s71
      %p73 = scmp.eq.s32.totalorder %s72, 0
      %s75 = sadd.s32 %s74, 1
      %s76 = scalar_select %p73, %s74, %s75
      %p79 = pneg %p73
      %p80 = scmp.eq.s32.totalorder %s15, 63
      %p81 = por %p79, %p80
      %p82 = scmp.ne.s32.totalorder %s74, %s77
      %p83 = scmp.eq.s32.totalorder %s15, 0
      %p84 = por %p82, %p83
      %p85 = scmp.ne.s32.totalorder %s74, %s77
      %p86 = scmp.eq.s32.totalorder %s20, 63
      %p87 = por %p85, %p86
      %p88 = scmp.ne.s32.totalorder %s77, %s78
      %p89 = scmp.eq.s32.totalorder %s20, 0
      %p90 = por %p88, %p89
      %p91 = scmp.ne.s32.totalorder %s77, %s78
      %p92 = scmp.eq.s32.totalorder %s21, 63
      %p93 = por %p91, %p92
      %p95 = scmp.ne.s32.totalorder %s78, %s94
      %p96 = scmp.eq.s32.totalorder %s21, 0
      %p97 = por %p95, %p96
      %s98 = ssub.s32 %s22, %s41
      %s99 = ssub.s32 %s23, %s37
      %s100 = sor.u32 %s98, %s99
      %p101 = scmp.eq.s32.totalorder %s100, 0
      %s103 = sadd.s32 %s102, 1
      %s104 = scalar_select %p101, %s102, %s103
      %p107 = pneg %p101
      %p108 = scmp.eq.s32.totalorder %s15, 63
      %p109 = por %p107, %p108
      %p110 = scmp.ne.s32.totalorder %s102, %s105
      %p111 = scmp.eq.s32.totalorder %s15, 0
      %p112 = por %p110, %p111
      %p113 = scmp.ne.s32.totalorder %s102, %s105
      %p114 = scmp.eq.s32.totalorder %s20, 63
      %p115 = por %p113, %p114
      %p116 = scmp.ne.s32.totalorder %s105, %s106
      %p117 = scmp.eq.s32.totalorder %s20, 0
      %p118 = por %p116, %p117
      %p119 = scmp.ne.s32.totalorder %s105, %s106
      %p120 = scmp.eq.s32.totalorder %s21, 63
      %p121 = por %p119, %p120
      %p123 = scmp.ne.s32.totalorder %s106, %s122
      %p124 = scmp.eq.s32.totalorder %s21, 0
      %p125 = por %p123, %p124
      %p126 = scmp.le.s32.totalorder 1, %s15
      %p127 = scmp.lt.s32.totalorder %s15, 65
      %p128 = pnand %p126, %p127
      %p129 = pneg %p128
      // Predicated region
      $region9: #{tpu_custom_call.1} parent=5 // pred_check
        _
      $region10: #{tpu_custom_call.1} parent=5 // pred_check_branch
        %131 = sbr.rel (%p128) target = $region12
      $region11: #{tpu_custom_call.1} parent=5 // pred_region
        %s132 = ssub.s32 %s15, 1
        // Predicated region
        $region13: #{tpu_custom_call.1} parent=11 // pred_check
          %p133 = pneg %p90
        $region14: #{tpu_custom_call.1} parent=11 // pred_check_branch
          %135 = sbr.rel (%p133) target = $region16
        $region15: #{tpu_custom_call.1} parent=11 // pred_region
          %s136 = smul.u32 16, %s27
          %s138 = ssub.s32 1024, 1024
          %139 = vsyncadd [#allocation7], %s138
          %s140 = sadd.s32 %s26, %s136
          %s141 = smul.addr %s140, 64
          %s142 = scalar_lea.hbm %s1, %s141
          %s143 = sshll.u32 [#allocation6], 4
          %s144 = int_to_ptr.vmem [resolvable:$true] %s143
          %149 = dma.hbm_to_vmem [thread:$0]  %s142, 1024, %s144, [#allocation7], 64, 64, 4
        $region16: #{tpu_custom_call.1} parent=11 // pred_fallthru
          _
      $region12: #{tpu_custom_call.1} parent=5 // pred_fallthru
        _
      %p150 = scmp.lt.s32.totalorder %s15, 64
      // Predicated region
      $region17: #{tpu_custom_call.1} parent=5 // pred_check
        %p151 = pneg %p150
      $region18: #{tpu_custom_call.1} parent=5 // pred_check_branch
        %153 = sbr.rel (%p151) target = $region20
      $region19: #{tpu_custom_call.1} parent=5 // pred_region
        // Predicated region
        $region21: #{tpu_custom_call.1} parent=19 // pred_check
          %p154 = pneg %p56
        $region22: #{tpu_custom_call.1} parent=19 // pred_check_branch
          %156 = sbr.rel (%p154) target = $region24
        $region23: #{tpu_custom_call.1} parent=19 // pred_region
          %s157 = sand.u32 %s46, 1
          %s158 = scalar_lea.sflag [#allocation4], %s157
          %s159 = sand.u32 %s46, 1
          %s160 = smul.addr %s159, 128
          %s161 = scalar_lea.vmem [#allocation3], %s160
          %s162 = smul.u32 32, %s22
          %s164 = ssub.s32 2048, 2048
          %165 = vsyncadd %s158, %s164
          %s166 = sadd.s32 %s24, %s162
          %s167 = smul.addr %s166, 64
          %s168 = scalar_lea.hbm %s0, %s167
          %s169 = sshll.u32 %s161, 4
          %s170 = int_to_ptr.vmem [resolvable:$true] %s169
          %175 = dma.hbm_to_vmem [thread:$0]  %s168, 2048, %s170, %s158, 64, 64, 4
        $region24: #{tpu_custom_call.1} parent=19 // pred_fallthru
          _
      $region20: #{tpu_custom_call.1} parent=5 // pred_fallthru
        _
      %p176 = scmp.le.s32.totalorder 1, %s15
      %p177 = scmp.lt.s32.totalorder %s15, 65
      %p178 = pnand %p176, %p177
      %p179 = pneg %p178
      // Predicated region
      $region25: #{tpu_custom_call.1} parent=5 // pred_check
        _
      $region26: #{tpu_custom_call.1} parent=5 // pred_check_branch
        %181 = sbr.rel (%p178) target = $region28
      $region27: #{tpu_custom_call.1} parent=5 // pred_region
        %s182 = ssub.s32 %s15, 1
        %s183 = sand.u32 %s49, 1
        %s184 = scalar_lea.sflag [#allocation4], %s183
        %s185 = sand.u32 %s49, 1
        %s186 = smul.addr %s185, 128
        %s187 = scalar_lea.vmem [#allocation3], %s186
        // Predicated region
        $region29: #{tpu_custom_call.1} parent=27 // pred_check
          %p188 = pneg %p62
        $region30: #{tpu_custom_call.1} parent=27 // pred_check_branch
          %190 = sbr.rel (%p188) target = $region32
        $region31: #{tpu_custom_call.1} parent=27 // pred_region
          %191 = dma.done %s184, 2048
        $region32: #{tpu_custom_call.1} parent=27 // pred_fallthru
          _
        // Predicated region
        $region33: #{tpu_custom_call.1} parent=27 // pred_check
          %p192 = pneg %p90
        $region34: #{tpu_custom_call.1} parent=27 // pred_check_branch
          %194 = sbr.rel (%p192) target = $region36
        $region35: #{tpu_custom_call.1} parent=27 // pred_region
          %195 = dma.done [#allocation7], 1024
        $region36: #{tpu_custom_call.1} parent=27 // pred_fallthru
          _
        %s196 = sand.u32 %s49, 1
        %s197 = scalar_lea.sflag [#allocation4], %s196
        %s198 = sand.u32 %s49, 1
        %s199 = smul.addr %s198, 128
        %s200 = scalar_lea.vmem [#allocation3], %s199
        %p201 = pneg %p62
        %p202 = pneg %p59
        %p203 = pneg %p90
        %p204 = pneg %p87
        %p205 = pneg %p118
        %p206 = pneg %p115
        %s207 = sand.u32 %s105, 1
        %s208 = scalar_lea.sflag [#allocation5], %s207
        %s209 = sand.u32 %s105, 1
        %s210 = smul.addr %s209, 128
        %s211 = scalar_lea.vmem [#allocation8], %s210
        %s212 = smul.u32 32, %s25
        %s213 = smul.u32 16, %s27
        %s214 = smul.u32 32, %s25
        %p216 = scmp.eq.s32.totalorder %s27, 0
        // Predicated region
        $region37: #{tpu_custom_call.1} parent=27 // pred_check
          %p217 = pneg %p216
        $region38: #{tpu_custom_call.1} parent=27 // pred_check_branch
          %219 = sbr.rel (%p217) target = $region40
        $region39: #{tpu_custom_call.1} parent=27 // pred_region
          %220 = vst [vmem:[#allocation2] sm:$0xff] 0.0
          %221 = vst [vmem:[#allocation2 + $0x8] sm:$0xff] 0.0
          %222 = vst [vmem:[#allocation2 + $0x10] sm:$0xff] 0.0
          %223 = vst [vmem:[#allocation2 + $0x18] sm:$0xff] 0.0
          %224 = vst [vmem:[#allocation2 + $0x20] sm:$0xff] 0.0
          %225 = vst [vmem:[#allocation2 + $0x28] sm:$0xff] 0.0
          %226 = vst [vmem:[#allocation2 + $0x30] sm:$0xff] 0.0
          %227 = vst [vmem:[#allocation2 + $0x38] sm:$0xff] 0.0
          %228 = vst [vmem:[#allocation2 + $0x40] sm:$0xff] 0.0
          %229 = vst [vmem:[#allocation2 + $0x48] sm:$0xff] 0.0
          %230 = vst [vmem:[#allocation2 + $0x50] sm:$0xff] 0.0
          %231 = vst [vmem:[#allocation2 + $0x58] sm:$0xff] 0.0
          %232 = vst [vmem:[#allocation2 + $0x60] sm:$0xff] 0.0
          %233 = vst [vmem:[#allocation2 + $0x68] sm:$0xff] 0.0
          %234 = vst [vmem:[#allocation2 + $0x70] sm:$0xff] 0.0
          %235 = vst [vmem:[#allocation2 + $0x78] sm:$0xff] 0.0
          %236 = vst [vmem:[#allocation2 + $0x80] sm:$0xff] 0.0
          %237 = vst [vmem:[#allocation2 + $0x88] sm:$0xff] 0.0
          %238 = vst [vmem:[#allocation2 + $0x90] sm:$0xff] 0.0
          %239 = vst [vmem:[#allocation2 + $0x98] sm:$0xff] 0.0
          %240 = vst [vmem:[#allocation2 + $0xa0] sm:$0xff] 0.0
          %241 = vst [vmem:[#allocation2 + $0xa8] sm:$0xff] 0.0
          %242 = vst [vmem:[#allocation2 + $0xb0] sm:$0xff] 0.0
          %243 = vst [vmem:[#allocation2 + $0xb8] sm:$0xff] 0.0
          %244 = vst [vmem:[#allocation2 + $0xc0] sm:$0xff] 0.0
          %245 = vst [vmem:[#allocation2 + $0xc8] sm:$0xff] 0.0
          %246 = vst [vmem:[#allocation2 + $0xd0] sm:$0xff] 0.0
          %247 = vst [vmem:[#allocation2 + $0xd8] sm:$0xff] 0.0
          %248 = vst [vmem:[#allocation2 + $0xe0] sm:$0xff] 0.0
          %249 = vst [vmem:[#allocation2 + $0xe8] sm:$0xff] 0.0
          %250 = vst [vmem:[#allocation2 + $0xf0] sm:$0xff] 0.0
          %251 = vst [vmem:[#allocation2 + $0xf8] sm:$0xff] 0.0
        $region40: #{tpu_custom_call.1} parent=27 // pred_fallthru
          _
        %v252 = vld [vmem:[#allocation2] sm:$0xff]
        %v253 = vld [vmem:[#allocation2 + $0x8] sm:$0xff]
        %v254 = vld [vmem:[#allocation2 + $0x10] sm:$0xff]
        %v255 = vld [vmem:[#allocation2 + $0x18] sm:$0xff]
        %v256 = vld [vmem:[#allocation2 + $0x20] sm:$0xff]
        %v257 = vld [vmem:[#allocation2 + $0x28] sm:$0xff]
        %v258 = vld [vmem:[#allocation2 + $0x30] sm:$0xff]
        %v259 = vld [vmem:[#allocation2 + $0x38] sm:$0xff]
        %v260 = vld [vmem:[#allocation2 + $0x40] sm:$0xff]
        %v261 = vld [vmem:[#allocation2 + $0x48] sm:$0xff]
        %v262 = vld [vmem:[#allocation2 + $0x50] sm:$0xff]
        %v263 = vld [vmem:[#allocation2 + $0x58] sm:$0xff]
        %v264 = vld [vmem:[#allocation2 + $0x60] sm:$0xff]
        %v265 = vld [vmem:[#allocation2 + $0x68] sm:$0xff]
        %v266 = vld [vmem:[#allocation2 + $0x70] sm:$0xff]
        %v267 = vld [vmem:[#allocation2 + $0x78] sm:$0xff]
        %v268 = vld [vmem:[#allocation2 + $0x80] sm:$0xff]
        %v269 = vld [vmem:[#allocation2 + $0x88] sm:$0xff]
        %v270 = vld [vmem:[#allocation2 + $0x90] sm:$0xff]
        %v271 = vld [vmem:[#allocation2 + $0x98] sm:$0xff]
        %v272 = vld [vmem:[#allocation2 + $0xa0] sm:$0xff]
        %v273 = vld [vmem:[#allocation2 + $0xa8] sm:$0xff]
        %v274 = vld [vmem:[#allocation2 + $0xb0] sm:$0xff]
        %v275 = vld [vmem:[#allocation2 + $0xb8] sm:$0xff]
        %v276 = vld [vmem:[#allocation2 + $0xc0] sm:$0xff]
        %v277 = vld [vmem:[#allocation2 + $0xc8] sm:$0xff]
        %v278 = vld [vmem:[#allocation2 + $0xd0] sm:$0xff]
        %v279 = vld [vmem:[#allocation2 + $0xd8] sm:$0xff]
        %v280 = vld [vmem:[#allocation2 + $0xe0] sm:$0xff]
        %v281 = vld [vmem:[#allocation2 + $0xe8] sm:$0xff]
        %v282 = vld [vmem:[#allocation2 + $0xf0] sm:$0xff]
        %v283 = vld [vmem:[#allocation2 + $0xf8] sm:$0xff]
        %v284 = vld [vmem:[%s187] sm:$0xf]
        %v285 = vld [vmem:[%s187 + $0x4] sm:$0xf]
        %v286 = vld [vmem:[%s187 + $0x8] sm:$0xf]
        %v287 = vld [vmem:[%s187 + $0xc] sm:$0xf]
        %v288 = vld [vmem:[%s187 + $0x10] sm:$0xf]
        %v289 = vld [vmem:[%s187 + $0x14] sm:$0xf]
        %v290 = vld [vmem:[%s187 + $0x18] sm:$0xf]
        %v291 = vld [vmem:[%s187 + $0x1c] sm:$0xf]
        %v292 = vld [vmem:[%s187 + $0x20] sm:$0xf]
        %v293 = vld [vmem:[%s187 + $0x24] sm:$0xf]
        %v294 = vld [vmem:[%s187 + $0x28] sm:$0xf]
        %v295 = vld [vmem:[%s187 + $0x2c] sm:$0xf]
        %v296 = vld [vmem:[%s187 + $0x30] sm:$0xf]
        %v297 = vld [vmem:[%s187 + $0x34] sm:$0xf]
        %v298 = vld [vmem:[%s187 + $0x38] sm:$0xf]
        %v299 = vld [vmem:[%s187 + $0x3c] sm:$0xf]
        %v300 = vld [vmem:[%s187 + $0x40] sm:$0xf]
        %v301 = vld [vmem:[%s187 + $0x44] sm:$0xf]
        %v302 = vld [vmem:[%s187 + $0x48] sm:$0xf]
        %v303 = vld [vmem:[%s187 + $0x4c] sm:$0xf]
        %v304 = vld [vmem:[%s187 + $0x50] sm:$0xf]
        %v305 = vld [vmem:[%s187 + $0x54] sm:$0xf]
        %v306 = vld [vmem:[%s187 + $0x58] sm:$0xf]
        %v307 = vld [vmem:[%s187 + $0x5c] sm:$0xf]
        %v308 = vld [vmem:[%s187 + $0x60] sm:$0xf]
        %v309 = vld [vmem:[%s187 + $0x64] sm:$0xf]
        %v310 = vld [vmem:[%s187 + $0x68] sm:$0xf]
        %v311 = vld [vmem:[%s187 + $0x6c] sm:$0xf]
        %v312 = vld [vmem:[%s187 + $0x70] sm:$0xf]
        %v313 = vld [vmem:[%s187 + $0x74] sm:$0xf]
        %v314 = vld [vmem:[%s187 + $0x78] sm:$0xf]
        %v315 = vld [vmem:[%s187 + $0x7c] sm:$0xf]
        %v316 = vld [vmem:[#allocation6] sm:$0xf]
        %v317 = vld [vmem:[#allocation6 + $0x4] sm:$0xf]
        %v318 = vld [vmem:[#allocation6 + $0x8] sm:$0xf]
        %v319 = vld [vmem:[#allocation6 + $0xc] sm:$0xf]
        %v320 = vld [vmem:[#allocation6 + $0x10] sm:$0xf]
        %v321 = vld [vmem:[#allocation6 + $0x14] sm:$0xf]
        %v322 = vld [vmem:[#allocation6 + $0x18] sm:$0xf]
        %v323 = vld [vmem:[#allocation6 + $0x1c] sm:$0xf]
        %v324 = vld [vmem:[#allocation6 + $0x20] sm:$0xf]
        %v325 = vld [vmem:[#allocation6 + $0x24] sm:$0xf]
        %v326 = vld [vmem:[#allocation6 + $0x28] sm:$0xf]
        %v327 = vld [vmem:[#allocation6 + $0x2c] sm:$0xf]
        %v328 = vld [vmem:[#allocation6 + $0x30] sm:$0xf]
        %v329 = vld [vmem:[#allocation6 + $0x34] sm:$0xf]
        %v330 = vld [vmem:[#allocation6 + $0x38] sm:$0xf]
        %v331 = vld [vmem:[#allocation6 + $0x3c] sm:$0xf]
        %v364 = vunpack.c.l.b16 %v284
        %v365 = vunpack.c.l.b16 %v285
        %v366 = vunpack.c.l.b16 %v286
        %v367 = vunpack.c.l.b16 %v287
        %v368 = vunpack.c.l.b16 %v288
        %v369 = vunpack.c.l.b16 %v289
        %v370 = vunpack.c.l.b16 %v290
        %v371 = vunpack.c.l.b16 %v291
        %v372 = vunpack.c.l.b16 %v292
        %v373 = vunpack.c.l.b16 %v293
        %v374 = vunpack.c.l.b16 %v294
        %v375 = vunpack.c.l.b16 %v295
        %v376 = vunpack.c.l.b16 %v296
        %v377 = vunpack.c.l.b16 %v297
        %v378 = vunpack.c.l.b16 %v298
        %v379 = vunpack.c.l.b16 %v299
        %v380 = vunpack.c.l.b16 %v300
        %v381 = vunpack.c.l.b16 %v301
        %v382 = vunpack.c.l.b16 %v302
        %v383 = vunpack.c.l.b16 %v303
        %v384 = vunpack.c.l.b16 %v304
        %v385 = vunpack.c.l.b16 %v305
        %v386 = vunpack.c.l.b16 %v306
        %v387 = vunpack.c.l.b16 %v307
        %v388 = vunpack.c.l.b16 %v308
        %v389 = vunpack.c.l.b16 %v309
        %v390 = vunpack.c.l.b16 %v310
        %v391 = vunpack.c.l.b16 %v311
        %v392 = vunpack.c.l.b16 %v312
        %v393 = vunpack.c.l.b16 %v313
        %v394 = vunpack.c.l.b16 %v314
        %v395 = vunpack.c.l.b16 %v315
        %v396 = vpack.c.b16 %v365, %v364
        %v397 = vpack.c.b16 %v367, %v366
        %v398 = vpack.c.b16 %v369, %v368
        %v399 = vpack.c.b16 %v371, %v370
        %v400 = vpack.c.b16 %v373, %v372
        %v401 = vpack.c.b16 %v375, %v374
        %v402 = vpack.c.b16 %v377, %v376
        %v403 = vpack.c.b16 %v379, %v378
        %v404 = vpack.c.b16 %v381, %v380
        %v405 = vpack.c.b16 %v383, %v382
        %v406 = vpack.c.b16 %v385, %v384
        %v407 = vpack.c.b16 %v387, %v386
        %v408 = vpack.c.b16 %v389, %v388
        %v409 = vpack.c.b16 %v391, %v390
        %v410 = vpack.c.b16 %v393, %v392
        %v411 = vpack.c.b16 %v395, %v394
        %v444 = vunpack.c.l.b16 %v316
        %v445 = vunpack.c.l.b16 %v317
        %v446 = vunpack.c.l.b16 %v318
        %v447 = vunpack.c.l.b16 %v319
        %v448 = vunpack.c.l.b16 %v320
        %v449 = vunpack.c.l.b16 %v321
        %v450 = vunpack.c.l.b16 %v322
        %v451 = vunpack.c.l.b16 %v323
        %v452 = vunpack.c.l.b16 %v324
        %v453 = vunpack.c.l.b16 %v325
        %v454 = vunpack.c.l.b16 %v326
        %v455 = vunpack.c.l.b16 %v327
        %v456 = vunpack.c.l.b16 %v328
        %v457 = vunpack.c.l.b16 %v329
        %v458 = vunpack.c.l.b16 %v330
        %v459 = vunpack.c.l.b16 %v331
        %v460 = vpack.c.b16 %v445, %v444
        %v461 = vpack.c.b16 %v447, %v446
        %v462 = vpack.c.b16 %v449, %v448
        %v463 = vpack.c.b16 %v451, %v450
        %v464 = vpack.c.b16 %v453, %v452
        %v465 = vpack.c.b16 %v455, %v454
        %v466 = vpack.c.b16 %v457, %v456
        %v467 = vpack.c.b16 %v459, %v458
        %476 = vmatprep.subr.bf16.mxu0 0
        %477 = vmatpush1.bf16.msra.mxu0 %v460
        %478 = vmatprep.subr.bf16.mxu0 0
        %479 = vmatpush1.bf16.msra.mxu0 %v461
        %480 = vmatprep.subr.bf16.mxu0 0
        %481 = vmatpush1.bf16.msra.mxu0 %v462
        %482 = vmatprep.subr.bf16.mxu0 0
        %483 = vmatpush1.bf16.msra.mxu0 %v463
        %484 = vmatprep.subr.bf16.mxu0 0
        %485 = vmatpush1.bf16.msra.mxu0 %v464
        %486 = vmatprep.subr.bf16.mxu0 0
        %487 = vmatpush1.bf16.msra.mxu0 %v465
        %488 = vmatprep.subr.bf16.mxu0 0
        %489 = vmatpush1.bf16.msra.mxu0 %v466
        %490 = vmatprep.subr.bf16.mxu0 0
        %491 = vmatpush1.bf16.msra.mxu0 %v467
        %492 = vmatprep.subr.bf16.mxu0 0
        %493 = vmatpush1.bf16.msra.mxu0 0
        %494 = vmatprep.subr.bf16.mxu0 0
        %495 = vmatpush1.bf16.msra.mxu0 0
        %496 = vmatprep.subr.bf16.mxu0 0
        %497 = vmatpush1.bf16.msra.mxu0 0
        %498 = vmatprep.subr.bf16.mxu0 0
        %499 = vmatpush1.bf16.msra.mxu0 0
        %500 = vmatprep.subr.bf16.mxu0 0
        %501 = vmatpush1.bf16.msra.mxu0 0
        %502 = vmatprep.subr.bf16.mxu0 0
        %503 = vmatpush1.bf16.msra.mxu0 0
        %504 = vmatprep.subr.bf16.mxu0 0
        %505 = vmatpush1.bf16.msra.mxu0 0
        %506 = vmatprep.subr.bf16.mxu0 0
        %507 = vmatpush1.bf16.msra.mxu0 0
        %508 = vmatprep.mubr.bf16.mxu0 0
        %509 = vmatmul.mubr.bf16.gmra.mrb[0].mxu0 %v396
        %v510 = vpop.f32.mrb[0].mxu0
        %v511 = vadd.f32 0.0, %v510
        %v512 = vpop.f32.mrb[0].mxu0
        %v513 = vpop.f32.mrb[0].mxu0
        %v514 = vadd.f32 0.0, %v513
        %v515 = vpop.f32.mrb[0].mxu0
        %516 = vmatprep.mubr.bf16.mxu0 0
        %517 = vmatmul.mubr.bf16.gmra.mrb[0].mxu0 %v397
        %v518 = vpop.f32.mrb[0].mxu0
        %v519 = vadd.f32 0.0, %v518
        %v520 = vpop.f32.mrb[0].mxu0
        %v521 = vpop.f32.mrb[0].mxu0
        %v522 = vadd.f32 0.0, %v521
        %v523 = vpop.f32.mrb[0].mxu0
        %524 = vmatprep.mubr.bf16.mxu0 0
        %525 = vmatmul.mubr.bf16.gmra.mrb[0].mxu0 %v398
        %v526 = vpop.f32.mrb[0].mxu0
        %v527 = vadd.f32 0.0, %v526
        %v528 = vpop.f32.mrb[0].mxu0
        %v529 = vpop.f32.mrb[0].mxu0
        %v530 = vadd.f32 0.0, %v529
        %v531 = vpop.f32.mrb[0].mxu0
        %532 = vmatprep.mubr.bf16.mxu0 0
        %533 = vmatmul.mubr.bf16.gmra.mrb[0].mxu0 %v399
        %v534 = vpop.f32.mrb[0].mxu0
        %v535 = vadd.f32 0.0, %v534
        %v536 = vpop.f32.mrb[0].mxu0
        %v537 = vpop.f32.mrb[0].mxu0
        %v538 = vadd.f32 0.0, %v537
        %v539 = vpop.f32.mrb[0].mxu0
        %540 = vmatprep.mubr.bf16.mxu0 0
        %541 = vmatmul.mubr.bf16.gmra.mrb[0].mxu0 %v400
        %v542 = vpop.f32.mrb[0].mxu0
        %v543 = vadd.f32 0.0, %v542
        %v544 = vpop.f32.mrb[0].mxu0
        %v545 = vpop.f32.mrb[0].mxu0
        %v546 = vadd.f32 0.0, %v545
        %v547 = vpop.f32.mrb[0].mxu0
        %548 = vmatprep.mubr.bf16.mxu0 0
        %549 = vmatmul.mubr.bf16.gmra.mrb[0].mxu0 %v401
        %v550 = vpop.f32.mrb[0].mxu0
        %v551 = vadd.f32 0.0, %v550
        %v552 = vpop.f32.mrb[0].mxu0
        %v553 = vpop.f32.mrb[0].mxu0
        %v554 = vadd.f32 0.0, %v553
        %v555 = vpop.f32.mrb[0].mxu0
        %556 = vmatprep.mubr.bf16.mxu0 0
        %557 = vmatmul.mubr.bf16.gmra.mrb[0].mxu0 %v402
        %v558 = vpop.f32.mrb[0].mxu0
        %v559 = vadd.f32 0.0, %v558
        %v560 = vpop.f32.mrb[0].mxu0
        %v561 = vpop.f32.mrb[0].mxu0
        %v562 = vadd.f32 0.0, %v561
        %v563 = vpop.f32.mrb[0].mxu0
        %564 = vmatprep.mubr.bf16.mxu0 0
        %565 = vmatmul.mubr.bf16.gmra.mrb[0].mxu0 %v403
        %v566 = vpop.f32.mrb[0].mxu0
        %v567 = vadd.f32 0.0, %v566
        %v568 = vpop.f32.mrb[0].mxu0
        %v569 = vpop.f32.mrb[0].mxu0
        %v570 = vadd.f32 0.0, %v569
        %v571 = vpop.f32.mrb[0].mxu0
        %572 = vmatprep.mubr.bf16.mxu0 0
        %573 = vmatmul.mubr.bf16.gmra.mrb[0].mxu0 %v404
        %v574 = vpop.f32.mrb[0].mxu0
        %v575 = vadd.f32 0.0, %v574
        %v576 = vpop.f32.mrb[0].mxu0
        %v577 = vpop.f32.mrb[0].mxu0
        %v578 = vadd.f32 0.0, %v577
        %v579 = vpop.f32.mrb[0].mxu0
        %580 = vmatprep.mubr.bf16.mxu0 0
        %581 = vmatmul.mubr.bf16.gmra.mrb[0].mxu0 %v405
        %v582 = vpop.f32.mrb[0].mxu0
        %v583 = vadd.f32 0.0, %v582
        %v584 = vpop.f32.mrb[0].mxu0
        %v585 = vpop.f32.mrb[0].mxu0
        %v586 = vadd.f32 0.0, %v585
        %v587 = vpop.f32.mrb[0].mxu0
        %588 = vmatprep.mubr.bf16.mxu0 0
        %589 = vmatmul.mubr.bf16.gmra.mrb[0].mxu0 %v406
        %v590 = vpop.f32.mrb[0].mxu0
        %v591 = vadd.f32 0.0, %v590
        %v592 = vpop.f32.mrb[0].mxu0
        %v593 = vpop.f32.mrb[0].mxu0
        %v594 = vadd.f32 0.0, %v593
        %v595 = vpop.f32.mrb[0].mxu0
        %596 = vmatprep.mubr.bf16.mxu0 0
        %597 = vmatmul.mubr.bf16.gmra.mrb[0].mxu0 %v407
        %v598 = vpop.f32.mrb[0].mxu0
        %v599 = vadd.f32 0.0, %v598
        %v600 = vpop.f32.mrb[0].mxu0
        %v601 = vpop.f32.mrb[0].mxu0
        %v602 = vadd.f32 0.0, %v601
        %v603 = vpop.f32.mrb[0].mxu0
        %604 = vmatprep.mubr.bf16.mxu0 0
        %605 = vmatmul.mubr.bf16.gmra.mrb[0].mxu0 %v408
        %v606 = vpop.f32.mrb[0].mxu0
        %v607 = vadd.f32 0.0, %v606
        %v608 = vpop.f32.mrb[0].mxu0
        %v609 = vpop.f32.mrb[0].mxu0
        %v610 = vadd.f32 0.0, %v609
        %v611 = vpop.f32.mrb[0].mxu0
        %612 = vmatprep.mubr.bf16.mxu0 0
        %613 = vmatmul.mubr.bf16.gmra.mrb[0].mxu0 %v409
        %v614 = vpop.f32.mrb[0].mxu0
        %v615 = vadd.f32 0.0, %v614
        %v616 = vpop.f32.mrb[0].mxu0
        %v617 = vpop.f32.mrb[0].mxu0
        %v618 = vadd.f32 0.0, %v617
        %v619 = vpop.f32.mrb[0].mxu0
        %620 = vmatprep.mubr.bf16.mxu0 0
        %621 = vmatmul.mubr.bf16.gmra.mrb[0].mxu0 %v410
        %v622 = vpop.f32.mrb[0].mxu0
        %v623 = vadd.f32 0.0, %v622
        %v624 = vpop.f32.mrb[0].mxu0
        %v625 = vpop.f32.mrb[0].mxu0
        %v626 = vadd.f32 0.0, %v625
        %v627 = vpop.f32.mrb[0].mxu0
        %628 = vmatprep.mubr.bf16.mxu0 0
        %629 = vmatmul.mubr.bf16.gmra.mrb[0].mxu0 %v411
        %v630 = vpop.f32.mrb[0].mxu0
        %v631 = vadd.f32 0.0, %v630
        %v632 = vpop.f32.mrb[0].mxu0
        %v633 = vpop.f32.mrb[0].mxu0
        %v634 = vadd.f32 0.0, %v633
        %v635 = vpop.f32.mrb[0].mxu0
        %636 = vdwg.mxu0
        %v637 = vadd.f32 %v252, %v511
        %v638 = vadd.f32 %v253, %v514
        %v639 = vadd.f32 %v254, %v519
        %v640 = vadd.f32 %v255, %v522
        %v641 = vadd.f32 %v256, %v527
        %v642 = vadd.f32 %v257, %v530
        %v643 = vadd.f32 %v258, %v535
        %v644 = vadd.f32 %v259, %v538
        %v645 = vadd.f32 %v260, %v543
        %v646 = vadd.f32 %v261, %v546
        %v647 = vadd.f32 %v262, %v551
        %v648 = vadd.f32 %v263, %v554
        %v649 = vadd.f32 %v264, %v559
        %v650 = vadd.f32 %v265, %v562
        %v651 = vadd.f32 %v266, %v567
        %v652 = vadd.f32 %v267, %v570
        %v653 = vadd.f32 %v268, %v575
        %v654 = vadd.f32 %v269, %v578
        %v655 = vadd.f32 %v270, %v583
        %v656 = vadd.f32 %v271, %v586
        %v657 = vadd.f32 %v272, %v591
        %v658 = vadd.f32 %v273, %v594
        %v659 = vadd.f32 %v274, %v599
        %v660 = vadd.f32 %v275, %v602
        %v661 = vadd.f32 %v276, %v607
        %v662 = vadd.f32 %v277, %v610
        %v663 = vadd.f32 %v278, %v615
        %v664 = vadd.f32 %v279, %v618
        %v665 = vadd.f32 %v280, %v623
        %v666 = vadd.f32 %v281, %v626
        %v667 = vadd.f32 %v282, %v631
        %v668 = vadd.f32 %v283, %v634
        %669 = vst [vmem:[#allocation2] sm:$0xff] %v637
        %670 = vst [vmem:[#allocation2 + $0x8] sm:$0xff] %v638
        %671 = vst [vmem:[#allocation2 + $0x10] sm:$0xff] %v639
        %672 = vst [vmem:[#allocation2 + $0x18] sm:$0xff] %v640
        %673 = vst [vmem:[#allocation2 + $0x20] sm:$0xff] %v641
        %674 = vst [vmem:[#allocation2 + $0x28] sm:$0xff] %v642
        %675 = vst [vmem:[#allocation2 + $0x30] sm:$0xff] %v643
        %676 = vst [vmem:[#allocation2 + $0x38] sm:$0xff] %v644
        %677 = vst [vmem:[#allocation2 + $0x40] sm:$0xff] %v645
        %678 = vst [vmem:[#allocation2 + $0x48] sm:$0xff] %v646
        %679 = vst [vmem:[#allocation2 + $0x50] sm:$0xff] %v647
        %680 = vst [vmem:[#allocation2 + $0x58] sm:$0xff] %v648
        %681 = vst [vmem:[#allocation2 + $0x60] sm:$0xff] %v649
        %682 = vst [vmem:[#allocation2 + $0x68] sm:$0xff] %v650
        %683 = vst [vmem:[#allocation2 + $0x70] sm:$0xff] %v651
        %684 = vst [vmem:[#allocation2 + $0x78] sm:$0xff] %v652
        %685 = vst [vmem:[#allocation2 + $0x80] sm:$0xff] %v653
        %686 = vst [vmem:[#allocation2 + $0x88] sm:$0xff] %v654
        %687 = vst [vmem:[#allocation2 + $0x90] sm:$0xff] %v655
        %688 = vst [vmem:[#allocation2 + $0x98] sm:$0xff] %v656
        %689 = vst [vmem:[#allocation2 + $0xa0] sm:$0xff] %v657
        %690 = vst [vmem:[#allocation2 + $0xa8] sm:$0xff] %v658
        %691 = vst [vmem:[#allocation2 + $0xb0] sm:$0xff] %v659
        %692 = vst [vmem:[#allocation2 + $0xb8] sm:$0xff] %v660
        %693 = vst [vmem:[#allocation2 + $0xc0] sm:$0xff] %v661
        %694 = vst [vmem:[#allocation2 + $0xc8] sm:$0xff] %v662
        %695 = vst [vmem:[#allocation2 + $0xd0] sm:$0xff] %v663
        %696 = vst [vmem:[#allocation2 + $0xd8] sm:$0xff] %v664
        %697 = vst [vmem:[#allocation2 + $0xe0] sm:$0xff] %v665
        %698 = vst [vmem:[#allocation2 + $0xe8] sm:$0xff] %v666
        %699 = vst [vmem:[#allocation2 + $0xf0] sm:$0xff] %v667
        %700 = vst [vmem:[#allocation2 + $0xf8] sm:$0xff] %v668
        // Predicated region
        $region41: #{tpu_custom_call.1} parent=27 // pred_check
          %p701 = pneg %p216
        $region42: #{tpu_custom_call.1} parent=27 // pred_check_branch
          %703 = sbr.rel (%p701) target = $region44
        $region43: #{tpu_custom_call.1} parent=27 // pred_region
          %v704 = vld [vmem:[#allocation2] sm:$0xff]
          %v705 = vld [vmem:[#allocation2 + $0x8] sm:$0xff]
          %v706 = vld [vmem:[#allocation2 + $0x10] sm:$0xff]
          %v707 = vld [vmem:[#allocation2 + $0x18] sm:$0xff]
          %v708 = vld [vmem:[#allocation2 + $0x20] sm:$0xff]
          %v709 = vld [vmem:[#allocation2 + $0x28] sm:$0xff]
          %v710 = vld [vmem:[#allocation2 + $0x30] sm:$0xff]
          %v711 = vld [vmem:[#allocation2 + $0x38] sm:$0xff]
          %v712 = vld [vmem:[#allocation2 + $0x40] sm:$0xff]
          %v713 = vld [vmem:[#allocation2 + $0x48] sm:$0xff]
          %v714 = vld [vmem:[#allocation2 + $0x50] sm:$0xff]
          %v715 = vld [vmem:[#allocation2 + $0x58] sm:$0xff]
          %v716 = vld [vmem:[#allocation2 + $0x60] sm:$0xff]
          %v717 = vld [vmem:[#allocation2 + $0x68] sm:$0xff]
          %v718 = vld [vmem:[#allocation2 + $0x70] sm:$0xff]
          %v719 = vld [vmem:[#allocation2 + $0x78] sm:$0xff]
          %v720 = vld [vmem:[#allocation2 + $0x80] sm:$0xff]
          %v721 = vld [vmem:[#allocation2 + $0x88] sm:$0xff]
          %v722 = vld [vmem:[#allocation2 + $0x90] sm:$0xff]
          %v723 = vld [vmem:[#allocation2 + $0x98] sm:$0xff]
          %v724 = vld [vmem:[#allocation2 + $0xa0] sm:$0xff]
          %v725 = vld [vmem:[#allocation2 + $0xa8] sm:$0xff]
          %v726 = vld [vmem:[#allocation2 + $0xb0] sm:$0xff]
          %v727 = vld [vmem:[#allocation2 + $0xb8] sm:$0xff]
          %v728 = vld [vmem:[#allocation2 + $0xc0] sm:$0xff]
          %v729 = vld [vmem:[#allocation2 + $0xc8] sm:$0xff]
          %v730 = vld [vmem:[#allocation2 + $0xd0] sm:$0xff]
          %v731 = vld [vmem:[#allocation2 + $0xd8] sm:$0xff]
          %v732 = vld [vmem:[#allocation2 + $0xe0] sm:$0xff]
          %v733 = vld [vmem:[#allocation2 + $0xe8] sm:$0xff]
          %v734 = vld [vmem:[#allocation2 + $0xf0] sm:$0xff]
          %v735 = vld [vmem:[#allocation2 + $0xf8] sm:$0xff]
          %vm736 = vcmp.ge.f32.partialorder %v704, 0.0
          %vm737 = vcmp.ge.f32.partialorder %v705, 0.0
          %vm738 = vcmp.ge.f32.partialorder %v706, 0.0
          %vm739 = vcmp.ge.f32.partialorder %v707, 0.0
          %vm740 = vcmp.ge.f32.partialorder %v708, 0.0
          %vm741 = vcmp.ge.f32.partialorder %v709, 0.0
          %vm742 = vcmp.ge.f32.partialorder %v710, 0.0
          %vm743 = vcmp.ge.f32.partialorder %v711, 0.0
          %vm744 = vcmp.ge.f32.partialorder %v712, 0.0
          %vm745 = vcmp.ge.f32.partialorder %v713, 0.0
          %vm746 = vcmp.ge.f32.partialorder %v714, 0.0
          %vm747 = vcmp.ge.f32.partialorder %v715, 0.0
          %vm748 = vcmp.ge.f32.partialorder %v716, 0.0
          %vm749 = vcmp.ge.f32.partialorder %v717, 0.0
          %vm750 = vcmp.ge.f32.partialorder %v718, 0.0
          %vm751 = vcmp.ge.f32.partialorder %v719, 0.0
          %vm752 = vcmp.ge.f32.partialorder %v720, 0.0
          %vm753 = vcmp.ge.f32.partialorder %v721, 0.0
          %vm754 = vcmp.ge.f32.partialorder %v722, 0.0
          %vm755 = vcmp.ge.f32.partialorder %v723, 0.0
          %vm756 = vcmp.ge.f32.partialorder %v724, 0.0
          %vm757 = vcmp.ge.f32.partialorder %v725, 0.0
          %vm758 = vcmp.ge.f32.partialorder %v726, 0.0
          %vm759 = vcmp.ge.f32.partialorder %v727, 0.0
          %vm760 = vcmp.ge.f32.partialorder %v728, 0.0
          %vm761 = vcmp.ge.f32.partialorder %v729, 0.0
          %vm762 = vcmp.ge.f32.partialorder %v730, 0.0
          %vm763 = vcmp.ge.f32.partialorder %v731, 0.0
          %vm764 = vcmp.ge.f32.partialorder %v732, 0.0
          %vm765 = vcmp.ge.f32.partialorder %v733, 0.0
          %vm766 = vcmp.ge.f32.partialorder %v734, 0.0
          %vm767 = vcmp.ge.f32.partialorder %v735, 0.0
          %v768 = vmul.f32 %v704, 0.2
          %v769 = vmul.f32 %v705, 0.2
          %v770 = vmul.f32 %v706, 0.2
          %v771 = vmul.f32 %v707, 0.2
          %v772 = vmul.f32 %v708, 0.2
          %v773 = vmul.f32 %v709, 0.2
          %v774 = vmul.f32 %v710, 0.2
          %v775 = vmul.f32 %v711, 0.2
          %v776 = vmul.f32 %v712, 0.2
          %v777 = vmul.f32 %v713, 0.2
          %v778 = vmul.f32 %v714, 0.2
          %v779 = vmul.f32 %v715, 0.2
          %v780 = vmul.f32 %v716, 0.2
          %v781 = vmul.f32 %v717, 0.2
          %v782 = vmul.f32 %v718, 0.2
          %v783 = vmul.f32 %v719, 0.2
          %v784 = vmul.f32 %v720, 0.2
          %v785 = vmul.f32 %v721, 0.2
          %v786 = vmul.f32 %v722, 0.2
          %v787 = vmul.f32 %v723, 0.2
          %v788 = vmul.f32 %v724, 0.2
          %v789 = vmul.f32 %v725, 0.2
          %v790 = vmul.f32 %v726, 0.2
          %v791 = vmul.f32 %v727, 0.2
          %v792 = vmul.f32 %v728, 0.2
          %v793 = vmul.f32 %v729, 0.2
          %v794 = vmul.f32 %v730, 0.2
          %v795 = vmul.f32 %v731, 0.2
          %v796 = vmul.f32 %v732, 0.2
          %v797 = vmul.f32 %v733, 0.2
          %v798 = vmul.f32 %v734, 0.2
          %v799 = vmul.f32 %v735, 0.2
          %v800 = vsel %vm736, %v704, %v768
          %v801 = vsel %vm737, %v705, %v769
          %v802 = vsel %vm738, %v706, %v770
          %v803 = vsel %vm739, %v707, %v771
          %v804 = vsel %vm740, %v708, %v772
          %v805 = vsel %vm741, %v709, %v773
          %v806 = vsel %vm742, %v710, %v774
          %v807 = vsel %vm743, %v711, %v775
          %v808 = vsel %vm744, %v712, %v776
          %v809 = vsel %vm745, %v713, %v777
          %v810 = vsel %vm746, %v714, %v778
          %v811 = vsel %vm747, %v715, %v779
          %v812 = vsel %vm748, %v716, %v780
          %v813 = vsel %vm749, %v717, %v781
          %v814 = vsel %vm750, %v718, %v782
          %v815 = vsel %vm751, %v719, %v783
          %v816 = vsel %vm752, %v720, %v784
          %v817 = vsel %vm753, %v721, %v785
          %v818 = vsel %vm754, %v722, %v786
          %v819 = vsel %vm755, %v723, %v787
          %v820 = vsel %vm756, %v724, %v788
          %v821 = vsel %vm757, %v725, %v789
          %v822 = vsel %vm758, %v726, %v790
          %v823 = vsel %vm759, %v727, %v791
          %v824 = vsel %vm760, %v728, %v792
          %v825 = vsel %vm761, %v729, %v793
          %v826 = vsel %vm762, %v730, %v794
          %v827 = vsel %vm763, %v731, %v795
          %v828 = vsel %vm764, %v732, %v796
          %v829 = vsel %vm765, %v733, %v797
          %v830 = vsel %vm766, %v734, %v798
          %v831 = vsel %vm767, %v735, %v799
          %v832 = vpack.c.bf16 %v801, %v800
          %v833 = vpack.c.bf16 %v803, %v802
          %v834 = vpack.c.bf16 %v805, %v804
          %v835 = vpack.c.bf16 %v807, %v806
          %v836 = vpack.c.bf16 %v809, %v808
          %v837 = vpack.c.bf16 %v811, %v810
          %v838 = vpack.c.bf16 %v813, %v812
          %v839 = vpack.c.bf16 %v815, %v814
          %v840 = vpack.c.bf16 %v817, %v816
          %v841 = vpack.c.bf16 %v819, %v818
          %v842 = vpack.c.bf16 %v821, %v820
          %v843 = vpack.c.bf16 %v823, %v822
          %v844 = vpack.c.bf16 %v825, %v824
          %v845 = vpack.c.bf16 %v827, %v826
          %v846 = vpack.c.bf16 %v829, %v828
          %v847 = vpack.c.bf16 %v831, %v830
          %v864 = vunpack.c.l.b16 %v832
          %v865 = vunpack.c.h.b16 %v832
          %v866 = vunpack.c.l.b16 %v833
          %v867 = vunpack.c.h.b16 %v833
          %v868 = vunpack.c.l.b16 %v834
          %v869 = vunpack.c.h.b16 %v834
          %v870 = vunpack.c.l.b16 %v835
          %v871 = vunpack.c.h.b16 %v835
          %v872 = vunpack.c.l.b16 %v836
          %v873 = vunpack.c.h.b16 %v836
          %v874 = vunpack.c.l.b16 %v837
          %v875 = vunpack.c.h.b16 %v837
          %v876 = vunpack.c.l.b16 %v838
          %v877 = vunpack.c.h.b16 %v838
          %v878 = vunpack.c.l.b16 %v839
          %v879 = vunpack.c.h.b16 %v839
          %v880 = vunpack.c.l.b16 %v840
          %v881 = vunpack.c.h.b16 %v840
          %v882 = vunpack.c.l.b16 %v841
          %v883 = vunpack.c.h.b16 %v841
          %v884 = vunpack.c.l.b16 %v842
          %v885 = vunpack.c.h.b16 %v842
          %v886 = vunpack.c.l.b16 %v843
          %v887 = vunpack.c.h.b16 %v843
          %v888 = vunpack.c.l.b16 %v844
          %v889 = vunpack.c.h.b16 %v844
          %v890 = vunpack.c.l.b16 %v845
          %v891 = vunpack.c.h.b16 %v845
          %v892 = vunpack.c.l.b16 %v846
          %v893 = vunpack.c.h.b16 %v846
          %v894 = vunpack.c.l.b16 %v847
          %v895 = vunpack.c.h.b16 %v847
          %v896 = vpack.c.b16 %v864, %v864
          %v897 = vpack.c.b16 %v865, %v865
          %v898 = vpack.c.b16 %v866, %v866
          %v899 = vpack.c.b16 %v867, %v867
          %v900 = vpack.c.b16 %v868, %v868
          %v901 = vpack.c.b16 %v869, %v869
          %v902 = vpack.c.b16 %v870, %v870
          %v903 = vpack.c.b16 %v871, %v871
          %v904 = vpack.c.b16 %v872, %v872
          %v905 = vpack.c.b16 %v873, %v873
          %v906 = vpack.c.b16 %v874, %v874
          %v907 = vpack.c.b16 %v875, %v875
          %v908 = vpack.c.b16 %v876, %v876
          %v909 = vpack.c.b16 %v877, %v877
          %v910 = vpack.c.b16 %v878, %v878
          %v911 = vpack.c.b16 %v879, %v879
          %v912 = vpack.c.b16 %v880, %v880
          %v913 = vpack.c.b16 %v881, %v881
          %v914 = vpack.c.b16 %v882, %v882
          %v915 = vpack.c.b16 %v883, %v883
          %v916 = vpack.c.b16 %v884, %v884
          %v917 = vpack.c.b16 %v885, %v885
          %v918 = vpack.c.b16 %v886, %v886
          %v919 = vpack.c.b16 %v887, %v887
          %v920 = vpack.c.b16 %v888, %v888
          %v921 = vpack.c.b16 %v889, %v889
          %v922 = vpack.c.b16 %v890, %v890
          %v923 = vpack.c.b16 %v891, %v891
          %v924 = vpack.c.b16 %v892, %v892
          %v925 = vpack.c.b16 %v893, %v893
          %v926 = vpack.c.b16 %v894, %v894
          %v927 = vpack.c.b16 %v895, %v895
          %960 = vst [vmem:[%s211] sm:$0xf] %v896
          %961 = vst [vmem:[%s211 + $0x4] sm:$0xf] %v897
          %962 = vst [vmem:[%s211 + $0x8] sm:$0xf] %v898
          %963 = vst [vmem:[%s211 + $0xc] sm:$0xf] %v899
          %964 = vst [vmem:[%s211 + $0x10] sm:$0xf] %v900
          %965 = vst [vmem:[%s211 + $0x14] sm:$0xf] %v901
          %966 = vst [vmem:[%s211 + $0x18] sm:$0xf] %v902
          %967 = vst [vmem:[%s211 + $0x1c] sm:$0xf] %v903
          %968 = vst [vmem:[%s211 + $0x20] sm:$0xf] %v904
          %969 = vst [vmem:[%s211 + $0x24] sm:$0xf] %v905
          %970 = vst [vmem:[%s211 + $0x28] sm:$0xf] %v906
          %971 = vst [vmem:[%s211 + $0x2c] sm:$0xf] %v907
          %972 = vst [vmem:[%s211 + $0x30] sm:$0xf] %v908
          %973 = vst [vmem:[%s211 + $0x34] sm:$0xf] %v909
          %974 = vst [vmem:[%s211 + $0x38] sm:$0xf] %v910
          %975 = vst [vmem:[%s211 + $0x3c] sm:$0xf] %v911
          %976 = vst [vmem:[%s211 + $0x40] sm:$0xf] %v912
          %977 = vst [vmem:[%s211 + $0x44] sm:$0xf] %v913
          %978 = vst [vmem:[%s211 + $0x48] sm:$0xf] %v914
          %979 = vst [vmem:[%s211 + $0x4c] sm:$0xf] %v915
          %980 = vst [vmem:[%s211 + $0x50] sm:$0xf] %v916
          %981 = vst [vmem:[%s211 + $0x54] sm:$0xf] %v917
          %982 = vst [vmem:[%s211 + $0x58] sm:$0xf] %v918
          %983 = vst [vmem:[%s211 + $0x5c] sm:$0xf] %v919
          %984 = vst [vmem:[%s211 + $0x60] sm:$0xf] %v920
          %985 = vst [vmem:[%s211 + $0x64] sm:$0xf] %v921
          %986 = vst [vmem:[%s211 + $0x68] sm:$0xf] %v922
          %987 = vst [vmem:[%s211 + $0x6c] sm:$0xf] %v923
          %988 = vst [vmem:[%s211 + $0x70] sm:$0xf] %v924
          %989 = vst [vmem:[%s211 + $0x74] sm:$0xf] %v925
          %990 = vst [vmem:[%s211 + $0x78] sm:$0xf] %v926
          %991 = vst [vmem:[%s211 + $0x7c] sm:$0xf] %v927
        $region44: #{tpu_custom_call.1} parent=27 // pred_fallthru
          _
        %s992 = sand.u32 %s105, 1
        %s993 = scalar_lea.sflag [#allocation5], %s992
        %s994 = sand.u32 %s105, 1
        %s995 = smul.addr %s994, 128
        %s996 = scalar_lea.vmem [#allocation8], %s995
        // Predicated region
        $region45: #{tpu_custom_call.1} parent=27 // pred_check
          %p997 = pneg %p115
        $region46: #{tpu_custom_call.1} parent=27 // pred_check_branch
          %999 = sbr.rel (%p997) target = $region48
        $region47: #{tpu_custom_call.1} parent=27 // pred_region
          %s1000 = smul.u32 32, %s25
          %s1002 = ssub.s32 2048, 2048
          %1003 = vsyncadd %s993, %s1002
          %s1004 = sadd.s32 %s26, %s1000
          %s1005 = smul.addr %s1004, 64
          %s1006 = scalar_lea.hbm %s2, %s1005
          %s1007 = sshll.u32 %s996, 4
          %s1008 = int_to_ptr.vmem [resolvable:$true] %s1007
          %1013 = dma.vmem_to_hbm [thread:$0]  %s1008, 2048, %s1006, %s993, 64, 64, 4
        $region48: #{tpu_custom_call.1} parent=27 // pred_fallthru
          _
      $region28: #{tpu_custom_call.1} parent=5 // pred_fallthru
        _
      %p1014 = scmp.le.s32.totalorder 2, %s15
      // Predicated region
      $region49: #{tpu_custom_call.1} parent=5 // pred_check
        %p1015 = pneg %p1014
      $region50: #{tpu_custom_call.1} parent=5 // pred_check_branch
        %1017 = sbr.rel (%p1015) target = $region52
      $region51: #{tpu_custom_call.1} parent=5 // pred_region
        %s1018 = ssub.s32 %s15, 2
        // Predicated region
        $region53: #{tpu_custom_call.1} parent=51 // pred_check
          %p1019 = pneg %p121
        $region54: #{tpu_custom_call.1} parent=51 // pred_check_branch
          %1021 = sbr.rel (%p1019) target = $region56
        $region55: #{tpu_custom_call.1} parent=51 // pred_region
          %s1022 = sand.u32 %s106, 1
          %s1023 = scalar_lea.sflag [#allocation5], %s1022
          %s1024 = sand.u32 %s106, 1
          %s1025 = smul.addr %s1024, 128
          %s1026 = scalar_lea.vmem [#allocation8], %s1025
          %1027 = dma.done %s1023, 2048
        $region56: #{tpu_custom_call.1} parent=51 // pred_fallthru
          _
      $region52: #{tpu_custom_call.1} parent=5 // pred_fallthru
        _
    $region6: #{tpu_custom_call.1} parent=1 // loop_footer
      %s19 = sadd.s32 1, %s15
    $region7: #{tpu_custom_call.1} parent=1 // loop_footer_branch
      %14 = sbr.rel target = $region3
    $region8: #{tpu_custom_call.1} parent=1 // loop_exit
      _
    %1028 = vsyncpa [#allocation4], 1
    %s1029 = scalar_lea.sflag [#allocation4], 1
    %1030 = vsyncpa %s1029, 1
    %1031 = vsyncpa [#allocation7], 1
    %1032 = vsyncpa [#allocation5], 1
    %s1033 = scalar_lea.sflag [#allocation5], 1
    %1034 = vsyncpa %s1033, 1

</llo_original>
